<compile_context>
chip_gen: v6e
topology: v6e:2x2x1
jax: 0.10.0
libtpu: 0.0.40
codegen_flags: <defaults>
</compile_context>

<pallas_src>
import functools

import jax
import jax.numpy as jnp
from jax.experimental import pallas as pl
from jax.experimental.pallas import tpu as pltpu


def _round_up(x, m):
    return ((x + m - 1) // m) * m


def value_nn_kernel(t_ref,
                    w1_ref, b1_ref,
                    w2_ref, b2_ref,
                    w3_ref, b3_ref,
                    wh_ref, bh_ref,
                    out_ref):
    """One batch tile: t (TB,1) -> out (TB,8) = [m00,m01,m10,m11,offset,0,0,0].

    Elementwise compute dtype follows the small weights' dtype: bf16 on
    v6e/v7x (bf16 VALU packs 2 elems/lane), f32 on v5e (no bf16 VALU)."""
    cdt = w1_ref.dtype

    # time_embedding: Linear(1, H).  Contraction dim is 1, so a broadcast
    # multiply on the VPU beats a degenerate MXU matmul.
    t = t_ref[...].astype(cdt)                                   # (TB, 1)
    h = jnp.maximum(t * w1_ref[...] + b1_ref[...], 0.0)          # (TB, H) cdt

    # hidden_layer1 / hidden_layer2: Linear(H, H) + ReLU.  bf16 MXU feeds,
    # f32 accumulation; accumulator cast once to cdt, bias + ReLU in cdt.
    h = jnp.maximum(
        jnp.dot(h.astype(jnp.bfloat16), w2_ref[...],
                preferred_element_type=jnp.float32).astype(cdt) + b2_ref[...],
        0.0)                                                     # (TB, H) cdt
    h = jnp.maximum(
        jnp.dot(h.astype(jnp.bfloat16), w3_ref[...],
                preferred_element_type=jnp.float32).astype(cdt) + b3_ref[...],
        0.0)                                                     # (TB, H) cdt

    # fused heads: one MXU pass producing [a, b, c, d, off, 0, 0, 0] in f32
    head = jnp.dot(h.astype(jnp.bfloat16), wh_ref[...],
                   preferred_element_type=jnp.float32) + bh_ref[...]   # (TB, 8)

    # ---- M @ M^T + 0.001*I on the flattened 2x2 (tiny vs the matmuls) ------
    # M = [[a, b], [c, d]]  =>  M @ M^T = [[a^2+b^2, ac+bd], [ac+bd, c^2+d^2]]
    a = head[:, 0:1]
    b = head[:, 1:2]
    c = head[:, 2:3]
    d = head[:, 3:4]
    m00 = a * a + b * b + 0.001
    m01 = a * c + b * d
    m11 = c * c + d * d + 0.001

    # single store of the lane-packed output tile; lanes 4:8 carry
    # [offset, 0, 0, 0] straight from the (zero-padded) fused head.
    out_ref[...] = jnp.concatenate([m00, m01, m01, m11, head[:, 4:8]], axis=1)


def init_params(key, hidden_size):
    """Deterministic PyTorch-style (uniform +/- 1/sqrt(fan_in)) initialization.

    Weights are stored as (in_features, out_features)."""
    dims = [(1, hidden_size),              # time_embedding
            (hidden_size, hidden_size),    # hidden_layer1
            (hidden_size, hidden_size),    # hidden_layer2
            (hidden_size, 4),              # matrix_output
            (hidden_size, 1)]              # offset_output
    params = []
    for (fan_in, fan_out) in dims:
        key, kw, kb = jax.random.split(key, 3)
        bound = 1.0 / jnp.sqrt(float(fan_in))
        w = jax.random.uniform(kw, (fan_in, fan_out), jnp.float32, -bound, bound)
        b = jax.random.uniform(kb, (1, fan_out), jnp.float32, -bound, bound)
        params += [w, b]
    return params


@functools.partial(
    jax.jit,
    static_argnames=("tile", "bf16_eltwise", "vmem_limit_bytes",
                     "single_buffer_weights"))
def _value_nn_forward_impl(t, params, *, tile, bf16_eltwise, vmem_limit_bytes,
                           single_buffer_weights):
    w1, b1, w2, b2, w3, b3, wm, bm, wo, bo = params
    hidden = w1.shape[1]

    # Fuse the two heads into one lane-packed (H, 8) weight / (1, 8) bias:
    # columns [0:4] = matrix_output, column [4] = offset_output, [5:8] = zero.
    wh = jnp.zeros((hidden, 8), jnp.float32).at[:, 0:4].set(wm).at[:, 4:5].set(wo)
    bh = jnp.zeros((1, 8), jnp.float32).at[:, 0:4].set(bm).at[:, 4:5].set(bo)

    # Elementwise dtype: bf16 on v6e/v7x, f32 on v5e.  MXU feeds always bf16.
    edt = jnp.bfloat16 if bf16_eltwise else jnp.float32
    w1c = w1.astype(edt)
    b1c = b1.astype(edt)
    b2c = b2.astype(edt)
    b3c = b3.astype(edt)
    w2b = w2.astype(jnp.bfloat16)
    w3b = w3.astype(jnp.bfloat16)
    whb = wh.astype(jnp.bfloat16)
    # head bias stays f32: (TB, 8) add is negligible and it feeds the output.

    t2 = t.reshape(-1, 1).astype(jnp.float32)
    batch = t2.shape[0]
    padded = _round_up(batch, tile)
    if padded != batch:
        t2 = jnp.pad(t2, ((0, padded - batch), (0, 0)))
    grid = (padded // tile,)

    def batch_spec(shape):
        return pl.BlockSpec(shape, lambda i: (i, 0))

    def const_spec(shape):
        if single_buffer_weights:
            # Weights never change across the grid: single-buffer them to free
            # VMEM headroom (default double-buffering is wasted on them).
            return pl.BlockSpec(shape, lambda i: (0, 0),
                                pipeline_mode=pl.Buffered(1))
        return pl.BlockSpec(shape, lambda i: (0, 0))

    # Advisory cost hint for the XLA scheduler.
    small_bytes = 2 if bf16_eltwise else 4
    flops = 2 * padded * hidden * (1 + 2 * hidden + 8)
    bytes_accessed = (
        padded * 4                          # t
        + padded * 8 * 4                    # output slab
        + 2 * hidden * small_bytes          # w1 + b1
        + 2 * hidden * hidden * 2           # w2, w3 (bf16)
        + 2 * hidden * small_bytes          # b2, b3
        + hidden * 8 * 2 + 8 * 4)           # fused head (bf16 W, f32 b)
    cost = pl.CostEstimate(flops=flops, transcendentals=0,
                           bytes_accessed=bytes_accessed)

    out = pl.pallas_call(
        value_nn_kernel,
        out_shape=jax.ShapeDtypeStruct((padded, 8), jnp.float32),
        grid_spec=pltpu.PrefetchScalarGridSpec(
            num_scalar_prefetch=0,
            grid=grid,
            in_specs=[
                batch_spec((tile, 1)),                 # t
                const_spec((1, hidden)),               # w1
                const_spec((1, hidden)),               # b1
                const_spec((hidden, hidden)),          # w2 (bf16)
                const_spec((1, hidden)),               # b2
                const_spec((hidden, hidden)),          # w3 (bf16)
                const_spec((1, hidden)),               # b3
                const_spec((hidden, 8)),               # fused head W (bf16)
                const_spec((1, 8)),                    # fused head b (f32)
            ],
            out_specs=batch_spec((tile, 8)),
        ),
        compiler_params=pltpu.CompilerParams(
            dimension_semantics=("parallel",),         # shard batch tiles on multi-TC parts
            vmem_limit_bytes=vmem_limit_bytes,         # allow the larger batch tiles
        ),
        cost_estimate=cost,
    )(t2, w1c, b1c, w2b, b2c, w3b, b3c, whb, bh)

    out = out[:batch]
    matrices = out[:, 0:4].reshape(batch, 2, 2)
    offset = out[:, 4:5]
    return matrices, offset


def _device_config():
    """Generation-aware defaults: (bf16_eltwise, multi_core, block_batch, vmem_limit)."""
    try:
        kind = jax.devices()[0].device_kind.lower()
    except Exception:  # pragma: no cover - defensive; assume generic TPU
        kind = ""
    bf16_eltwise = ("v6" in kind) or ("v7" in kind)        # v5e/v4: no bf16 VALU
    multi_core = ("v7" in kind) or ("v4" in kind) or ("v5p" in kind)
    if "v7" in kind:
        # v7x: 64 MiB VMEM per TC -> smaller tile, tighter scoped limit.
        return bf16_eltwise, multi_core, 2048, 48 * 1024 * 1024
    return bf16_eltwise, multi_core, 4096, 64 * 1024 * 1024


_SINGLE_BUFFER_OK = True  # flipped to False if pl.Buffered(1) fails to lower


def value_nn_forward(t, params, *, block_batch=None):
    """Pallas forward: t (B,) -> (matrices (B,2,2), offset (B,1))."""
    global _SINGLE_BUFFER_OK
    bf16_eltwise, multi_core, default_block, vmem_limit = _device_config()
    if block_batch is None:
        block_batch = default_block
    block_batch = max(8, _round_up(int(block_batch), 8))   # (8,128) sublane rule

    batch = int(t.reshape(-1).shape[0])
    batch8 = _round_up(batch, 8)
    tile = min(block_batch, batch8)
    if multi_core and batch8 > 8:
        # Ensure >= 2 grid steps so the "parallel" batch axis actually splits
        # across both TensorCores (v7x / megacore).
        tile = min(tile, _round_up(pl.cdiv(batch8, 2), 8))

    kwargs = dict(tile=tile, bf16_eltwise=bf16_eltwise,
                  vmem_limit_bytes=vmem_limit)
    if _SINGLE_BUFFER_OK:
        try:
            return _value_nn_forward_impl(t, params,
                                          single_buffer_weights=True, **kwargs)
        except Exception:
            # pl.Buffered(1) unsupported by this jax/libtpu: fall back to the
            # default double-buffered weight specs (pure VMEM-headroom change).
            _SINGLE_BUFFER_OK = False
    return _value_nn_forward_impl(t, params,
                                  single_buffer_weights=False, **kwargs)


def value_nn_forward_ref(t, params):
    """Pure-JAX f32 reference (mirrors the PyTorch forward) for validation."""
    w1, b1, w2, b2, w3, b3, wm, bm, wo, bo = params
    t2 = t.reshape(-1, 1).astype(jnp.float32)
    x = jnp.maximum(t2 @ w1 + b1, 0.0)
    x = jnp.maximum(x @ w2 + b2, 0.0)
    x = jnp.maximum(x @ w3 + b3, 0.0)
    me = (x @ wm + bm).reshape(-1, 2, 2)
    mats = me @ jnp.swapaxes(me, 1, 2) + 0.001 * jnp.eye(2, dtype=jnp.float32)[None]
    off = x @ wo + bo
    return mats, off


if __name__ == "__main__":
    hidden_size = 32   # small shapes for the demo (module default is 512)

    key = jax.random.PRNGKey(0)
    key, kparams, kt1, kt2 = jax.random.split(key, 4)
    params = init_params(kparams, hidden_size)

    # batch=6: ragged tail padding, single grid step.
    t_small = jax.random.uniform(kt1, (6,), jnp.float32)
    mats_s, off_s = value_nn_forward(t_small, params)
    # batch=40: exercises tiling / the >=2-step grid path on multi-core parts.
    t_large = jax.random.uniform(kt2, (40,), jnp.float32)
    mats_l, off_l = value_nn_forward(t_large, params)
    jax.block_until_ready((mats_s, off_s, mats_l, off_l))

    # sanity check vs the pure-JAX f32 reference (bf16 MXU feeds and, on
    # v6e/v7x, bf16 bias/ReLU => loose tolerances)
    for t_in, mats, off in ((t_small, mats_s, off_s), (t_large, mats_l, off_l)):
        mats_ref, off_ref = value_nn_forward_ref(t_in, params)
        n = t_in.shape[0]
        assert mats.shape == (n, 2, 2) and off.shape == (n, 1)
        assert jnp.allclose(mats, mats_ref, atol=5e-2, rtol=1e-1)
        assert jnp.allclose(off, off_ref, atol=5e-2, rtol=1e-1)

    print("KERNEL_OK")
</pallas_src>

<mosaic_0001>
module attributes {stable_mosaic.version = 11 : i64} {
  func.func @value_nn_kernel(%arg0: i32, %arg1: memref<8x1xf32, #tpu.memory_space<vmem>>, %arg2: memref<1x32xf32, #tpu.memory_space<vmem>>, %arg3: memref<1x32xf32, #tpu.memory_space<vmem>>, %arg4: memref<32x32xbf16, #tpu.memory_space<vmem>>, %arg5: memref<1x32xf32, #tpu.memory_space<vmem>>, %arg6: memref<32x32xbf16, #tpu.memory_space<vmem>>, %arg7: memref<1x32xf32, #tpu.memory_space<vmem>>, %arg8: memref<32x8xbf16, #tpu.memory_space<vmem>>, %arg9: memref<1x8xf32, #tpu.memory_space<vmem>>, %arg10: memref<8x8xf32, #tpu.memory_space<vmem>>) attributes {dimension_semantics = [#tpu.dimension_semantics<parallel>], iteration_bounds = array<i64: 1>, scalar_prefetch = 0 : i64, scratch_operands = 0 : i64, tpu.core_type = #tpu.core_type<tc>, window_params = [{transform_indices = @transform_0, window_bounds = array<i64: 8, 1>}, {pipeline_mode = #tpu.pipeline_mode<synchronous>, transform_indices = @transform_1, window_bounds = array<i64: 1, 32>}, {pipeline_mode = #tpu.pipeline_mode<synchronous>, transform_indices = @transform_2, window_bounds = array<i64: 1, 32>}, {pipeline_mode = #tpu.pipeline_mode<synchronous>, transform_indices = @transform_3, window_bounds = array<i64: 32, 32>}, {pipeline_mode = #tpu.pipeline_mode<synchronous>, transform_indices = @transform_4, window_bounds = array<i64: 1, 32>}, {pipeline_mode = #tpu.pipeline_mode<synchronous>, transform_indices = @transform_5, window_bounds = array<i64: 32, 32>}, {pipeline_mode = #tpu.pipeline_mode<synchronous>, transform_indices = @transform_6, window_bounds = array<i64: 1, 32>}, {pipeline_mode = #tpu.pipeline_mode<synchronous>, transform_indices = @transform_7, window_bounds = array<i64: 32, 8>}, {pipeline_mode = #tpu.pipeline_mode<synchronous>, transform_indices = @transform_8, window_bounds = array<i64: 1, 8>}, {transform_indices = @transform_9, window_bounds = array<i64: 8, 8>}]} {
    %c0 = arith.constant 0 : index
    %c0_0 = arith.constant 0 : index
    %0 = vector.load %arg1[%c0, %c0_0] : memref<8x1xf32, #tpu.memory_space<vmem>>, vector<8x1xf32>
    %c0_1 = arith.constant 0 : index
    %c0_2 = arith.constant 0 : index
    %1 = vector.load %arg2[%c0_1, %c0_2] : memref<1x32xf32, #tpu.memory_space<vmem>>, vector<1x32xf32>
    %2 = vector.broadcast %0 : vector<8x1xf32> to vector<8x32xf32>
    %3 = vector.broadcast %1 : vector<1x32xf32> to vector<8x32xf32>
    %4 = arith.mulf %2, %3 : vector<8x32xf32>
    %c0_3 = arith.constant 0 : index
    %c0_4 = arith.constant 0 : index
    %5 = vector.load %arg3[%c0_3, %c0_4] : memref<1x32xf32, #tpu.memory_space<vmem>>, vector<1x32xf32>
    %6 = vector.broadcast %5 : vector<1x32xf32> to vector<8x32xf32>
    %7 = arith.addf %4, %6 : vector<8x32xf32>
    %cst = arith.constant 0.000000e+00 : f32
    %8 = vector.broadcast %cst : f32 to vector<8x32xf32>
    %9 = arith.maximumf %7, %8 : vector<8x32xf32>
    %10 = arith.truncf %9 : vector<8x32xf32> to vector<8x32xbf16>
    %c0_5 = arith.constant 0 : index
    %c0_6 = arith.constant 0 : index
    %11 = vector.load %arg4[%c0_5, %c0_6] : memref<32x32xbf16, #tpu.memory_space<vmem>>, vector<32x32xbf16>
    %cst_7 = arith.constant dense<0.000000e+00> : vector<8x32xf32>
    %12 = tpu.matmul %10, %11, %cst_7 {dimension_numbers = #tpu.dot_dimension_numbers<[1], [0], [0], [1], [0, 0, 1, 1], [], []>} : vector<8x32xbf16>, vector<32x32xbf16>, vector<8x32xf32> -> vector<8x32xf32>
    %c0_8 = arith.constant 0 : index
    %c0_9 = arith.constant 0 : index
    %13 = vector.load %arg5[%c0_8, %c0_9] : memref<1x32xf32, #tpu.memory_space<vmem>>, vector<1x32xf32>
    %14 = vector.broadcast %13 : vector<1x32xf32> to vector<8x32xf32>
    %15 = arith.addf %12, %14 : vector<8x32xf32>
    %cst_10 = arith.constant 0.000000e+00 : f32
    %16 = vector.broadcast %cst_10 : f32 to vector<8x32xf32>
    %17 = arith.maximumf %15, %16 : vector<8x32xf32>
    %18 = arith.truncf %17 : vector<8x32xf32> to vector<8x32xbf16>
    %c0_11 = arith.constant 0 : index
    %c0_12 = arith.constant 0 : index
    %19 = vector.load %arg6[%c0_11, %c0_12] : memref<32x32xbf16, #tpu.memory_space<vmem>>, vector<32x32xbf16>
    %cst_13 = arith.constant dense<0.000000e+00> : vector<8x32xf32>
    %20 = tpu.matmul %18, %19, %cst_13 {dimension_numbers = #tpu.dot_dimension_numbers<[1], [0], [0], [1], [0, 0, 1, 1], [], []>} : vector<8x32xbf16>, vector<32x32xbf16>, vector<8x32xf32> -> vector<8x32xf32>
    %c0_14 = arith.constant 0 : index
    %c0_15 = arith.constant 0 : index
    %21 = vector.load %arg7[%c0_14, %c0_15] : memref<1x32xf32, #tpu.memory_space<vmem>>, vector<1x32xf32>
    %22 = vector.broadcast %21 : vector<1x32xf32> to vector<8x32xf32>
    %23 = arith.addf %20, %22 : vector<8x32xf32>
    %cst_16 = arith.constant 0.000000e+00 : f32
    %24 = vector.broadcast %cst_16 : f32 to vector<8x32xf32>
    %25 = arith.maximumf %23, %24 : vector<8x32xf32>
    %26 = arith.truncf %25 : vector<8x32xf32> to vector<8x32xbf16>
    %c0_17 = arith.constant 0 : index
    %c0_18 = arith.constant 0 : index
    %27 = vector.load %arg8[%c0_17, %c0_18] : memref<32x8xbf16, #tpu.memory_space<vmem>>, vector<32x8xbf16>
    %cst_19 = arith.constant dense<0.000000e+00> : vector<8x8xf32>
    %28 = tpu.matmul %26, %27, %cst_19 {dimension_numbers = #tpu.dot_dimension_numbers<[1], [0], [0], [1], [0, 0, 1, 1], [], []>} : vector<8x32xbf16>, vector<32x8xbf16>, vector<8x8xf32> -> vector<8x8xf32>
    %c0_20 = arith.constant 0 : index
    %c0_21 = arith.constant 0 : index
    %29 = vector.load %arg9[%c0_20, %c0_21] : memref<1x8xf32, #tpu.memory_space<vmem>>, vector<1x8xf32>
    %30 = vector.broadcast %29 : vector<1x8xf32> to vector<8x8xf32>
    %31 = arith.addf %28, %30 : vector<8x8xf32>
    %32 = vector.extract_strided_slice %31 {offsets = [0, 0], sizes = [8, 1], strides = [1, 1]} : vector<8x8xf32> to vector<8x1xf32>
    %33 = vector.extract_strided_slice %31 {offsets = [0, 1], sizes = [8, 1], strides = [1, 1]} : vector<8x8xf32> to vector<8x1xf32>
    %34 = vector.extract_strided_slice %31 {offsets = [0, 2], sizes = [8, 1], strides = [1, 1]} : vector<8x8xf32> to vector<8x1xf32>
    %35 = vector.extract_strided_slice %31 {offsets = [0, 3], sizes = [8, 1], strides = [1, 1]} : vector<8x8xf32> to vector<8x1xf32>
    %36 = arith.mulf %32, %32 : vector<8x1xf32>
    %37 = arith.mulf %33, %33 : vector<8x1xf32>
    %38 = arith.addf %36, %37 : vector<8x1xf32>
    %cst_22 = arith.constant 1.000000e-03 : f32
    %39 = vector.broadcast %cst_22 : f32 to vector<8x1xf32>
    %40 = arith.addf %38, %39 : vector<8x1xf32>
    %41 = arith.mulf %32, %34 : vector<8x1xf32>
    %42 = arith.mulf %33, %35 : vector<8x1xf32>
    %43 = arith.addf %41, %42 : vector<8x1xf32>
    %44 = arith.mulf %34, %34 : vector<8x1xf32>
    %45 = arith.mulf %35, %35 : vector<8x1xf32>
    %46 = arith.addf %44, %45 : vector<8x1xf32>
    %cst_23 = arith.constant 1.000000e-03 : f32
    %47 = vector.broadcast %cst_23 : f32 to vector<8x1xf32>
    %48 = arith.addf %46, %47 : vector<8x1xf32>
    %49 = vector.extract_strided_slice %31 {offsets = [0, 4], sizes = [8, 4], strides = [1, 1]} : vector<8x8xf32> to vector<8x4xf32>
    %50 = tpu.concatenate %40, %43, %43, %48, %49 in 1 : vector<8x1xf32>, vector<8x1xf32>, vector<8x1xf32>, vector<8x1xf32>, vector<8x4xf32> -> vector<8x8xf32>
    %c0_24 = arith.constant 0 : index
    %c0_25 = arith.constant 0 : index
    %51 = vector.load %arg10[%c0_24, %c0_25] : memref<8x8xf32, #tpu.memory_space<vmem>>, vector<8x8xf32>
    tpu.vector_store %arg10[%c0_24, %c0_25], %50 {strides = array<i32>} : memref<8x8xf32, #tpu.memory_space<vmem>>, vector<8x8xf32>,
    return
  }
  func.func @transform_0(%arg0: i32) -> (i32, i32) {
    %c0_i32 = arith.constant 0 : i32
    %c0_i32_0 = arith.constant 0 : i32
    return %arg0, %c0_i32 : i32, i32
  }
  func.func @transform_1(%arg0: i32) -> (i32, i32) {
    %c0_i32 = arith.constant 0 : i32
    %c0_i32_0 = arith.constant 0 : i32
    %c0_i32_1 = arith.constant 0 : i32
    return %c0_i32, %c0_i32_0 : i32, i32
  }
  func.func @transform_2(%arg0: i32) -> (i32, i32) {
    %c0_i32 = arith.constant 0 : i32
    %c0_i32_0 = arith.constant 0 : i32
    %c0_i32_1 = arith.constant 0 : i32
    return %c0_i32, %c0_i32_0 : i32, i32
  }
  func.func @transform_3(%arg0: i32) -> (i32, i32) {
    %c0_i32 = arith.constant 0 : i32
    %c0_i32_0 = arith.constant 0 : i32
    %c0_i32_1 = arith.constant 0 : i32
    return %c0_i32, %c0_i32_0 : i32, i32
  }
  func.func @transform_4(%arg0: i32) -> (i32, i32) {
    %c0_i32 = arith.constant 0 : i32
    %c0_i32_0 = arith.constant 0 : i32
    %c0_i32_1 = arith.constant 0 : i32
    return %c0_i32, %c0_i32_0 : i32, i32
  }
  func.func @transform_5(%arg0: i32) -> (i32, i32) {
    %c0_i32 = arith.constant 0 : i32
    %c0_i32_0 = arith.constant 0 : i32
    %c0_i32_1 = arith.constant 0 : i32
    return %c0_i32, %c0_i32_0 : i32, i32
  }
  func.func @transform_6(%arg0: i32) -> (i32, i32) {
    %c0_i32 = arith.constant 0 : i32
    %c0_i32_0 = arith.constant 0 : i32
    %c0_i32_1 = arith.constant 0 : i32
    return %c0_i32, %c0_i32_0 : i32, i32
  }
  func.func @transform_7(%arg0: i32) -> (i32, i32) {
    %c0_i32 = arith.constant 0 : i32
    %c0_i32_0 = arith.constant 0 : i32
    %c0_i32_1 = arith.constant 0 : i32
    return %c0_i32, %c0_i32_0 : i32, i32
  }
  func.func @transform_8(%arg0: i32) -> (i32, i32) {
    %c0_i32 = arith.constant 0 : i32
    %c0_i32_0 = arith.constant 0 : i32
    %c0_i32_1 = arith.constant 0 : i32
    return %c0_i32, %c0_i32_0 : i32, i32
  }
  func.func @transform_9(%arg0: i32) -> (i32, i32) {
    %c0_i32 = arith.constant 0 : i32
    %c0_i32_0 = arith.constant 0 : i32
    return %arg0, %c0_i32 : i32, i32
  }
}

module attributes {stable_mosaic.version = 11 : i64} {
  func.func @value_nn_kernel(%arg0: i32, %arg1: memref<8x1xf32, #tpu.memory_space<vmem>>, %arg2: memref<1x32xf32, #tpu.memory_space<vmem>>, %arg3: memref<1x32xf32, #tpu.memory_space<vmem>>, %arg4: memref<32x32xbf16, #tpu.memory_space<vmem>>, %arg5: memref<1x32xf32, #tpu.memory_space<vmem>>, %arg6: memref<32x32xbf16, #tpu.memory_space<vmem>>, %arg7: memref<1x32xf32, #tpu.memory_space<vmem>>, %arg8: memref<32x8xbf16, #tpu.memory_space<vmem>>, %arg9: memref<1x8xf32, #tpu.memory_space<vmem>>, %arg10: memref<8x8xf32, #tpu.memory_space<vmem>>) attributes {dimension_semantics = [#tpu.dimension_semantics<parallel>], iteration_bounds = array<i64: 1>, scalar_prefetch = 0 : i64, scratch_operands = 0 : i64, tpu.core_type = #tpu.core_type<tc>, window_params = [{transform_indices = @transform_0, window_bounds = array<i64: 8, 1>}, {pipeline_mode = #tpu.pipeline_mode<synchronous>, transform_indices = @transform_1, window_bounds = array<i64: 1, 32>}, {pipeline_mode = #tpu.pipeline_mode<synchronous>, transform_indices = @transform_2, window_bounds = array<i64: 1, 32>}, {pipeline_mode = #tpu.pipeline_mode<synchronous>, transform_indices = @transform_3, window_bounds = array<i64: 32, 32>}, {pipeline_mode = #tpu.pipeline_mode<synchronous>, transform_indices = @transform_4, window_bounds = array<i64: 1, 32>}, {pipeline_mode = #tpu.pipeline_mode<synchronous>, transform_indices = @transform_5, window_bounds = array<i64: 32, 32>}, {pipeline_mode = #tpu.pipeline_mode<synchronous>, transform_indices = @transform_6, window_bounds = array<i64: 1, 32>}, {pipeline_mode = #tpu.pipeline_mode<synchronous>, transform_indices = @transform_7, window_bounds = array<i64: 32, 8>}, {pipeline_mode = #tpu.pipeline_mode<synchronous>, transform_indices = @transform_8, window_bounds = array<i64: 1, 8>}, {transform_indices = @transform_9, window_bounds = array<i64: 8, 8>}]} {
    %c0 = arith.constant 0 : index
    %c0_0 = arith.constant 0 : index
    %0 = vector.load %arg1[%c0, %c0_0] : memref<8x1xf32, #tpu.memory_space<vmem>>, vector<8x1xf32>
    %c0_1 = arith.constant 0 : index
    %c0_2 = arith.constant 0 : index
    %1 = vector.load %arg2[%c0_1, %c0_2] : memref<1x32xf32, #tpu.memory_space<vmem>>, vector<1x32xf32>
    %2 = vector.broadcast %0 : vector<8x1xf32> to vector<8x32xf32>
    %3 = vector.broadcast %1 : vector<1x32xf32> to vector<8x32xf32>
    %4 = arith.mulf %2, %3 : vector<8x32xf32>
    %c0_3 = arith.constant 0 : index
    %c0_4 = arith.constant 0 : index
    %5 = vector.load %arg3[%c0_3, %c0_4] : memref<1x32xf32, #tpu.memory_space<vmem>>, vector<1x32xf32>
    %6 = vector.broadcast %5 : vector<1x32xf32> to vector<8x32xf32>
    %7 = arith.addf %4, %6 : vector<8x32xf32>
    %cst = arith.constant 0.000000e+00 : f32
    %8 = vector.broadcast %cst : f32 to vector<8x32xf32>
    %9 = arith.maximumf %7, %8 : vector<8x32xf32>
    %10 = arith.truncf %9 : vector<8x32xf32> to vector<8x32xbf16>
    %c0_5 = arith.constant 0 : index
    %c0_6 = arith.constant 0 : index
    %11 = vector.load %arg4[%c0_5, %c0_6] : memref<32x32xbf16, #tpu.memory_space<vmem>>, vector<32x32xbf16>
    %cst_7 = arith.constant dense<0.000000e+00> : vector<8x32xf32>
    %12 = tpu.matmul %10, %11, %cst_7 {dimension_numbers = #tpu.dot_dimension_numbers<[1], [0], [0], [1], [0, 0, 1, 1], [], []>} : vector<8x32xbf16>, vector<32x32xbf16>, vector<8x32xf32> -> vector<8x32xf32>
    %c0_8 = arith.constant 0 : index
    %c0_9 = arith.constant 0 : index
    %13 = vector.load %arg5[%c0_8, %c0_9] : memref<1x32xf32, #tpu.memory_space<vmem>>, vector<1x32xf32>
    %14 = vector.broadcast %13 : vector<1x32xf32> to vector<8x32xf32>
    %15 = arith.addf %12, %14 : vector<8x32xf32>
    %cst_10 = arith.constant 0.000000e+00 : f32
    %16 = vector.broadcast %cst_10 : f32 to vector<8x32xf32>
    %17 = arith.maximumf %15, %16 : vector<8x32xf32>
    %18 = arith.truncf %17 : vector<8x32xf32> to vector<8x32xbf16>
    %c0_11 = arith.constant 0 : index
    %c0_12 = arith.constant 0 : index
    %19 = vector.load %arg6[%c0_11, %c0_12] : memref<32x32xbf16, #tpu.memory_space<vmem>>, vector<32x32xbf16>
    %cst_13 = arith.constant dense<0.000000e+00> : vector<8x32xf32>
    %20 = tpu.matmul %18, %19, %cst_13 {dimension_numbers = #tpu.dot_dimension_numbers<[1], [0], [0], [1], [0, 0, 1, 1], [], []>} : vector<8x32xbf16>, vector<32x32xbf16>, vector<8x32xf32> -> vector<8x32xf32>
    %c0_14 = arith.constant 0 : index
    %c0_15 = arith.constant 0 : index
    %21 = vector.load %arg7[%c0_14, %c0_15] : memref<1x32xf32, #tpu.memory_space<vmem>>, vector<1x32xf32>
    %22 = vector.broadcast %21 : vector<1x32xf32> to vector<8x32xf32>
    %23 = arith.addf %20, %22 : vector<8x32xf32>
    %cst_16 = arith.constant 0.000000e+00 : f32
    %24 = vector.broadcast %cst_16 : f32 to vector<8x32xf32>
    %25 = arith.maximumf %23, %24 : vector<8x32xf32>
    %26 = arith.truncf %25 : vector<8x32xf32> to vector<8x32xbf16>
    %c0_17 = arith.constant 0 : index
    %c0_18 = arith.constant 0 : index
    %27 = vector.load %arg8[%c0_17, %c0_18] : memref<32x8xbf16, #tpu.memory_space<vmem>>, vector<32x8xbf16>
    %cst_19 = arith.constant dense<0.000000e+00> : vector<8x8xf32>
    %28 = tpu.matmul %26, %27, %cst_19 {dimension_numbers = #tpu.dot_dimension_numbers<[1], [0], [0], [1], [0, 0, 1, 1], [], []>} : vector<8x32xbf16>, vector<32x8xbf16>, vector<8x8xf32> -> vector<8x8xf32>
    %c0_20 = arith.constant 0 : index
    %c0_21 = arith.constant 0 : index
    %29 = vector.load %arg9[%c0_20, %c0_21] : memref<1x8xf32, #tpu.memory_space<vmem>>, vector<1x8xf32>
    %30 = vector.broadcast %29 : vector<1x8xf32> to vector<8x8xf32>
    %31 = arith.addf %28, %30 : vector<8x8xf32>
    %32 = vector.extract_strided_slice %31 {offsets = [0, 0], sizes = [8, 1], strides = [1, 1]} : vector<8x8xf32> to vector<8x1xf32>
    %33 = vector.extract_strided_slice %31 {offsets = [0, 1], sizes = [8, 1], strides = [1, 1]} : vector<8x8xf32> to vector<8x1xf32>
    %34 = vector.extract_strided_slice %31 {offsets = [0, 2], sizes = [8, 1], strides = [1, 1]} : vector<8x8xf32> to vector<8x1xf32>
    %35 = vector.extract_strided_slice %31 {offsets = [0, 3], sizes = [8, 1], strides = [1, 1]} : vector<8x8xf32> to vector<8x1xf32>
    %36 = arith.mulf %32, %32 : vector<8x1xf32>
    %37 = arith.mulf %33, %33 : vector<8x1xf32>
    %38 = arith.addf %36, %37 : vector<8x1xf32>
    %cst_22 = arith.constant 1.000000e-03 : f32
    %39 = vector.broadcast %cst_22 : f32 to vector<8x1xf32>
    %40 = arith.addf %38, %39 : vector<8x1xf32>
    %41 = arith.mulf %32, %34 : vector<8x1xf32>
    %42 = arith.mulf %33, %35 : vector<8x1xf32>
    %43 = arith.addf %41, %42 : vector<8x1xf32>
    %44 = arith.mulf %34, %34 : vector<8x1xf32>
    %45 = arith.mulf %35, %35 : vector<8x1xf32>
    %46 = arith.addf %44, %45 : vector<8x1xf32>
    %cst_23 = arith.constant 1.000000e-03 : f32
    %47 = vector.broadcast %cst_23 : f32 to vector<8x1xf32>
    %48 = arith.addf %46, %47 : vector<8x1xf32>
    %49 = vector.extract_strided_slice %31 {offsets = [0, 4], sizes = [8, 4], strides = [1, 1]} : vector<8x8xf32> to vector<8x4xf32>
    %50 = tpu.concatenate %40, %43, %43, %48, %49 in 1 : vector<8x1xf32>, vector<8x1xf32>, vector<8x1xf32>, vector<8x1xf32>, vector<8x4xf32> -> vector<8x8xf32>
    %c0_24 = arith.constant 0 : index
    %c0_25 = arith.constant 0 : index
    %51 = vector.load %arg10[%c0_24, %c0_25] : memref<8x8xf32, #tpu.memory_space<vmem>>, vector<8x8xf32>
    tpu.vector_store %arg10[%c0_24, %c0_25], %50 {strides = array<i32>} : memref<8x8xf32, #tpu.memory_space<vmem>>, vector<8x8xf32>,
    return
  }
  func.func @transform_0(%arg0: i32) -> (i32, i32) {
    %c0_i32 = arith.constant 0 : i32
    %c0_i32_0 = arith.constant 0 : i32
    return %arg0, %c0_i32 : i32, i32
  }
  func.func @transform_1(%arg0: i32) -> (i32, i32) {
    %c0_i32 = arith.constant 0 : i32
    %c0_i32_0 = arith.constant 0 : i32
    %c0_i32_1 = arith.constant 0 : i32
    return %c0_i32, %c0_i32_0 : i32, i32
  }
  func.func @transform_2(%arg0: i32) -> (i32, i32) {
    %c0_i32 = arith.constant 0 : i32
    %c0_i32_0 = arith.constant 0 : i32
    %c0_i32_1 = arith.constant 0 : i32
    return %c0_i32, %c0_i32_0 : i32, i32
  }
  func.func @transform_3(%arg0: i32) -> (i32, i32) {
    %c0_i32 = arith.constant 0 : i32
    %c0_i32_0 = arith.constant 0 : i32
    %c0_i32_1 = arith.constant 0 : i32
    return %c0_i32, %c0_i32_0 : i32, i32
  }
  func.func @transform_4(%arg0: i32) -> (i32, i32) {
    %c0_i32 = arith.constant 0 : i32
    %c0_i32_0 = arith.constant 0 : i32
    %c0_i32_1 = arith.constant 0 : i32
    return %c0_i32, %c0_i32_0 : i32, i32
  }
  func.func @transform_5(%arg0: i32) -> (i32, i32) {
    %c0_i32 = arith.constant 0 : i32
    %c0_i32_0 = arith.constant 0 : i32
    %c0_i32_1 = arith.constant 0 : i32
    return %c0_i32, %c0_i32_0 : i32, i32
  }
  func.func @transform_6(%arg0: i32) -> (i32, i32) {
    %c0_i32 = arith.constant 0 : i32
    %c0_i32_0 = arith.constant 0 : i32
    %c0_i32_1 = arith.constant 0 : i32
    return %c0_i32, %c0_i32_0 : i32, i32
  }
  func.func @transform_7(%arg0: i32) -> (i32, i32) {
    %c0_i32 = arith.constant 0 : i32
    %c0_i32_0 = arith.constant 0 : i32
    %c0_i32_1 = arith.constant 0 : i32
    return %c0_i32, %c0_i32_0 : i32, i32
  }
  func.func @transform_8(%arg0: i32) -> (i32, i32) {
    %c0_i32 = arith.constant 0 : i32
    %c0_i32_0 = arith.constant 0 : i32
    %c0_i32_1 = arith.constant 0 : i32
    return %c0_i32, %c0_i32_0 : i32, i32
  }
  func.func @transform_9(%arg0: i32) -> (i32, i32) {
    %c0_i32 = arith.constant 0 : i32
    %c0_i32_0 = arith.constant 0 : i32
    return %arg0, %c0_i32 : i32, i32
  }
}

</mosaic_0001>

<llo_original>
// kernel: _value_nn_forward_impl.1
$region0: #{_value_nn_forward_impl.1}
  #allocation0 [shape = 'u32[]', space=smem, size = 0x4, offset = 0x4, fixed_abs, tag = 'smem constant byte address 0x4 - core index']
  #allocation1 [shape = 'u32[144,128]{1,0:T(1,128)}', space=vmem, size = 0x12000, scoped, tag = 'internal scratch']
  %s0 = inlined_call_operand.vmem [shape: f32[8,1], index: 0, kind: input, shape index: {}]
  %s1 = inlined_call_operand.vmem [shape: f32[1,32], index: 1, kind: input, shape index: {}]
  %s2 = inlined_call_operand.vmem [shape: f32[1,32], index: 2, kind: input, shape index: {}]
  %s3 = inlined_call_operand.vmem [shape: bf16[32,32], index: 3, kind: input, shape index: {}]
  %s4 = inlined_call_operand.vmem [shape: f32[1,32], index: 4, kind: input, shape index: {}]
  %s5 = inlined_call_operand.vmem [shape: bf16[32,32], index: 5, kind: input, shape index: {}]
  %s6 = inlined_call_operand.vmem [shape: f32[1,32], index: 6, kind: input, shape index: {}]
  %s7 = inlined_call_operand.vmem [shape: bf16[32,8], index: 7, kind: input, shape index: {}]
  %s8 = inlined_call_operand.vmem [shape: f32[1,8], index: 8, kind: input, shape index: {}]
  %s9 = inlined_call_operand.vmem [shape: f32[8,8], index: 9, kind: output, shape index: {}]
  %s10 = sld [smem:[#allocation0]]
  $region46: #{_value_nn_forward_impl.1} parent=0
    _
  %s12 = ssub.s32 1, %s10
  %s13 = scalar_select 0, %s12, %s10
  // Predicated region
  $region2: #{_value_nn_forward_impl.1} parent=0 // pred_check
    _
  $region3: #{_value_nn_forward_impl.1} parent=0 // pred_check_branch
    %15 = sbr.rel (0) target = $region5
  $region4: #{_value_nn_forward_impl.1} parent=0 // pred_region
    _
  $region5: #{_value_nn_forward_impl.1} parent=0 // pred_fallthru
    _
  // Predicated region
  $region6: #{_value_nn_forward_impl.1} parent=0 // pred_check
    _
  $region7: #{_value_nn_forward_impl.1} parent=0 // pred_check_branch
    %17 = sbr.rel (0) target = $region9
  $region8: #{_value_nn_forward_impl.1} parent=0 // pred_region
    _
  $region9: #{_value_nn_forward_impl.1} parent=0 // pred_fallthru
    _
  // Predicated region
  $region10: #{_value_nn_forward_impl.1} parent=0 // pred_check
    _
  $region11: #{_value_nn_forward_impl.1} parent=0 // pred_check_branch
    %19 = sbr.rel (0) target = $region13
  $region12: #{_value_nn_forward_impl.1} parent=0 // pred_region
    _
  $region13: #{_value_nn_forward_impl.1} parent=0 // pred_fallthru
    _
  // Predicated region
  $region14: #{_value_nn_forward_impl.1} parent=0 // pred_check
    _
  $region15: #{_value_nn_forward_impl.1} parent=0 // pred_check_branch
    %21 = sbr.rel (0) target = $region17
  $region16: #{_value_nn_forward_impl.1} parent=0 // pred_region
    _
  $region17: #{_value_nn_forward_impl.1} parent=0 // pred_fallthru
    _
  // Predicated region
  $region18: #{_value_nn_forward_impl.1} parent=0 // pred_check
    _
  $region19: #{_value_nn_forward_impl.1} parent=0 // pred_check_branch
    %23 = sbr.rel (0) target = $region21
  $region20: #{_value_nn_forward_impl.1} parent=0 // pred_region
    _
  $region21: #{_value_nn_forward_impl.1} parent=0 // pred_fallthru
    _
  // Predicated region
  $region22: #{_value_nn_forward_impl.1} parent=0 // pred_check
    _
  $region23: #{_value_nn_forward_impl.1} parent=0 // pred_check_branch
    %25 = sbr.rel (0) target = $region25
  $region24: #{_value_nn_forward_impl.1} parent=0 // pred_region
    _
  $region25: #{_value_nn_forward_impl.1} parent=0 // pred_fallthru
    _
  // Predicated region
  $region26: #{_value_nn_forward_impl.1} parent=0 // pred_check
    _
  $region27: #{_value_nn_forward_impl.1} parent=0 // pred_check_branch
    %27 = sbr.rel (0) target = $region29
  $region28: #{_value_nn_forward_impl.1} parent=0 // pred_region
    _
  $region29: #{_value_nn_forward_impl.1} parent=0 // pred_fallthru
    _
  // Predicated region
  $region30: #{_value_nn_forward_impl.1} parent=0 // pred_check
    _
  $region31: #{_value_nn_forward_impl.1} parent=0 // pred_check_branch
    %29 = sbr.rel (0) target = $region33
  $region32: #{_value_nn_forward_impl.1} parent=0 // pred_region
    _
  $region33: #{_value_nn_forward_impl.1} parent=0 // pred_fallthru
    _
  // Predicated region
  $region34: #{_value_nn_forward_impl.1} parent=0 // pred_check
    _
  $region35: #{_value_nn_forward_impl.1} parent=0 // pred_check_branch
    %31 = sbr.rel (0) target = $region37
  $region36: #{_value_nn_forward_impl.1} parent=0 // pred_region
    _
  $region37: #{_value_nn_forward_impl.1} parent=0 // pred_fallthru
    _
  %v33 = vld [vmem:[%s0] sm:$0xff]
  %v34 = vld [vmem:[%s1] sm:$0x1]
  %36 = vset.pattern.permute.xlu0 0
  %37 = vperm.xlu0 %36, %v33
  %v38 = vpop.permute.xlu0 %37
  %v41 = vlaneseq
  %v42 = vshrl.u32 %v41, 7
  %v43 = vsub.s32 0, %v42
  %v44 = vrot.slane %v34, %v43
  %v46 = vmul.f32 %v38, %v44
  %v47 = vld [vmem:[%s2] sm:$0x1]
  %v49 = vlaneseq
  %v50 = vshrl.u32 %v49, 7
  %v51 = vsub.s32 0, %v50
  %v52 = vrot.slane %v47, %v51
  %v54 = vadd.f32 %v46, %v52
  %v55 = vmax.f32 %v54, 0.0
  %v56 = vpack.c.bf16 %v55, %v55
  %v57 = vld [vmem:[%s3] sm:$0xf]
  %v58 = vld [vmem:[%s3 + $0x4] sm:$0xf]
  %v59 = vld [vmem:[%s3 + $0x8] sm:$0xf]
  %v60 = vld [vmem:[%s3 + $0xc] sm:$0xf]
  %v61 = vld [vmem:[%s4] sm:$0x1]
  %v63 = vlaneseq
  %v64 = vshrl.u32 %v63, 7
  %v65 = vsub.s32 0, %v64
  %v66 = vrot.slane %v61, %v65
  %v72 = vunpack.c.l.b16 %v57
  %v73 = vunpack.c.l.b16 %v58
  %v74 = vunpack.c.l.b16 %v59
  %v75 = vunpack.c.l.b16 %v60
  %v76 = vpack.c.b16 %v73, %v72
  %v77 = vpack.c.b16 %v75, %v74
  %vm80 = vcmask 261120
  %v82 = vsel %vm80, %v56, 0
  %84 = vmatprep.subr.bf16.mxu0 0
  %85 = vmatpush1.bf16.msra.mxu0 0
  %86 = vmatprep.subr.bf16.mxu0 0
  %87 = vmatpush1.bf16.msra.mxu0 0
  %88 = vmatprep.subr.bf16.mxu0 0
  %89 = vmatpush1.bf16.msra.mxu0 0
  %90 = vmatprep.subr.bf16.mxu0 0
  %91 = vmatpush1.bf16.msra.mxu0 0
  %92 = vmatprep.subr.bf16.mxu0 0
  %93 = vmatpush1.bf16.msra.mxu0 0
  %94 = vmatprep.subr.bf16.mxu0 0
  %95 = vmatpush1.bf16.msra.mxu0 0
  %96 = vmatprep.subr.bf16.mxu0 0
  %97 = vmatpush1.bf16.msra.mxu0 %v77
  %98 = vmatprep.subr.bf16.mxu0 0
  %99 = vmatpush1.bf16.msra.mxu0 %v76
  %100 = vmatprep.subr.bf16.mxu0 0
  %101 = vmatpush2.bf16.msra.mxu0 0
  %102 = vmatprep.subr.bf16.mxu0 0
  %103 = vmatpush2.bf16.msra.mxu0 0
  %104 = vmatprep.subr.bf16.mxu0 0
  %105 = vmatpush2.bf16.msra.mxu0 0
  %106 = vmatprep.subr.bf16.mxu0 0
  %107 = vmatpush2.bf16.msra.mxu0 0
  %108 = vmatprep.subr.bf16.mxu0 0
  %109 = vmatpush2.bf16.msra.mxu0 0
  %110 = vmatprep.subr.bf16.mxu0 0
  %111 = vmatpush2.bf16.msra.mxu0 0
  %112 = vmatprep.subr.bf16.mxu0 0
  %113 = vmatpush2.bf16.msra.mxu0 0
  %114 = vmatprep.subr.bf16.mxu0 0
  %115 = vmatpush2.bf16.msra.mxu0 0
  %116 = vmatprep.mubr.bf16.mxu0 0
  %117 = vmatmul.mubr.bf16.gmra.mxu0 %v82
  %v118 = vpop.f32.mrf.mxu0
  %v119 = vadd.f32 %v66, %v118
  %v120 = vpop.f32.mrf.mxu0
  %v121 = vpop.f32.mrf.mxu0
  %v122 = vpop.f32.mrf.mxu0
  %123 = vdwg.mxu0
  %v124 = vmax.f32 %v119, 0.0
  %v125 = vpack.c.bf16 %v124, %v124
  %v126 = vld [vmem:[%s5] sm:$0xf]
  %v127 = vld [vmem:[%s5 + $0x4] sm:$0xf]
  %v128 = vld [vmem:[%s5 + $0x8] sm:$0xf]
  %v129 = vld [vmem:[%s5 + $0xc] sm:$0xf]
  %v130 = vld [vmem:[%s6] sm:$0x1]
  %v132 = vlaneseq
  %v133 = vshrl.u32 %v132, 7
  %v134 = vsub.s32 0, %v133
  %v135 = vrot.slane %v130, %v134
  %v141 = vunpack.c.l.b16 %v126
  %v142 = vunpack.c.l.b16 %v127
  %v143 = vunpack.c.l.b16 %v128
  %v144 = vunpack.c.l.b16 %v129
  %v145 = vpack.c.b16 %v142, %v141
  %v146 = vpack.c.b16 %v144, %v143
  %v150 = vsel %vm80, %v125, 0
  %152 = vmatprep.subr.bf16.mxu0 0
  %153 = vmatpush1.bf16.msra.mxu0 0
  %154 = vmatprep.subr.bf16.mxu0 0
  %155 = vmatpush1.bf16.msra.mxu0 0
  %156 = vmatprep.subr.bf16.mxu0 0
  %157 = vmatpush1.bf16.msra.mxu0 0
  %158 = vmatprep.subr.bf16.mxu0 0
  %159 = vmatpush1.bf16.msra.mxu0 0
  %160 = vmatprep.subr.bf16.mxu0 0
  %161 = vmatpush1.bf16.msra.mxu0 0
  %162 = vmatprep.subr.bf16.mxu0 0
  %163 = vmatpush1.bf16.msra.mxu0 0
  %164 = vmatprep.subr.bf16.mxu0 0
  %165 = vmatpush1.bf16.msra.mxu0 %v146
  %166 = vmatprep.subr.bf16.mxu0 0
  %167 = vmatpush1.bf16.msra.mxu0 %v145
  %168 = vmatprep.subr.bf16.mxu0 0
  %169 = vmatpush2.bf16.msra.mxu0 0
  %170 = vmatprep.subr.bf16.mxu0 0
  %171 = vmatpush2.bf16.msra.mxu0 0
  %172 = vmatprep.subr.bf16.mxu0 0
  %173 = vmatpush2.bf16.msra.mxu0 0
  %174 = vmatprep.subr.bf16.mxu0 0
  %175 = vmatpush2.bf16.msra.mxu0 0
  %176 = vmatprep.subr.bf16.mxu0 0
  %177 = vmatpush2.bf16.msra.mxu0 0
  %178 = vmatprep.subr.bf16.mxu0 0
  %179 = vmatpush2.bf16.msra.mxu0 0
  %180 = vmatprep.subr.bf16.mxu0 0
  %181 = vmatpush2.bf16.msra.mxu0 0
  %182 = vmatprep.subr.bf16.mxu0 0
  %183 = vmatpush2.bf16.msra.mxu0 0
  %184 = vmatprep.mubr.bf16.mxu0 0
  %185 = vmatmul.mubr.bf16.gmra.mxu0 %v150
  %v186 = vpop.f32.mrf.mxu0
  %v187 = vadd.f32 %v135, %v186
  %v188 = vpop.f32.mrf.mxu0
  %v189 = vpop.f32.mrf.mxu0
  %v190 = vpop.f32.mrf.mxu0
  %191 = vdwg.mxu0
  %v192 = vmax.f32 %v187, 0.0
  %v193 = vpack.c.bf16 %v192, %v192
  %v194 = vld [vmem:[%s7] sm:$0xf]
  %v195 = vld [vmem:[%s7 + $0x4] sm:$0xf]
  %v196 = vld [vmem:[%s7 + $0x8] sm:$0xf]
  %v197 = vld [vmem:[%s7 + $0xc] sm:$0xf]
  %v198 = vld [vmem:[%s8] sm:$0x1]
  %v200 = vlaneseq
  %v201 = vshrl.u32 %v200, 7
  %v202 = vsub.s32 0, %v201
  %v203 = vrot.slane %v198, %v202
  %v209 = vunpack.c.l.b16 %v194
  %v210 = vunpack.c.l.b16 %v195
  %v211 = vunpack.c.l.b16 %v196
  %v212 = vunpack.c.l.b16 %v197
  %v213 = vpack.c.b16 %v210, %v209
  %v214 = vpack.c.b16 %v212, %v211
  %v218 = vsel %vm80, %v193, 0
  %220 = vmatprep.subr.bf16.mxu0 0
  %221 = vmatpush1.bf16.msra.mxu0 0
  %222 = vmatprep.subr.bf16.mxu0 0
  %223 = vmatpush1.bf16.msra.mxu0 0
  %224 = vmatprep.subr.bf16.mxu0 0
  %225 = vmatpush1.bf16.msra.mxu0 0
  %226 = vmatprep.subr.bf16.mxu0 0
  %227 = vmatpush1.bf16.msra.mxu0 0
  %228 = vmatprep.subr.bf16.mxu0 0
  %229 = vmatpush1.bf16.msra.mxu0 0
  %230 = vmatprep.subr.bf16.mxu0 0
  %231 = vmatpush1.bf16.msra.mxu0 0
  %232 = vmatprep.subr.bf16.mxu0 0
  %233 = vmatpush1.bf16.msra.mxu0 %v214
  %234 = vmatprep.subr.bf16.mxu0 0
  %235 = vmatpush1.bf16.msra.mxu0 %v213
  %236 = vmatprep.subr.bf16.mxu0 0
  %237 = vmatpush2.bf16.msra.mxu0 0
  %238 = vmatprep.subr.bf16.mxu0 0
  %239 = vmatpush2.bf16.msra.mxu0 0
  %240 = vmatprep.subr.bf16.mxu0 0
  %241 = vmatpush2.bf16.msra.mxu0 0
  %242 = vmatprep.subr.bf16.mxu0 0
  %243 = vmatpush2.bf16.msra.mxu0 0
  %244 = vmatprep.subr.bf16.mxu0 0
  %245 = vmatpush2.bf16.msra.mxu0 0
  %246 = vmatprep.subr.bf16.mxu0 0
  %247 = vmatpush2.bf16.msra.mxu0 0
  %248 = vmatprep.subr.bf16.mxu0 0
  %249 = vmatpush2.bf16.msra.mxu0 0
  %250 = vmatprep.subr.bf16.mxu0 0
  %251 = vmatpush2.bf16.msra.mxu0 0
  %252 = vmatprep.mubr.bf16.mxu0 0
  %253 = vmatmul.mubr.bf16.gmra.mxu0 %v218
  %v254 = vpop.f32.mrf.mxu0
  %v255 = vadd.f32 %v203, %v254
  %v256 = vpop.f32.mrf.mxu0
  %v257 = vpop.f32.mrf.mxu0
  %v258 = vpop.f32.mrf.mxu0
  %259 = vdwg.mxu0
  %v260 = vmul.f32 %v255, %v255
  %262 = vrot.lane.b32.xlu0 %v260, 127
  %v263 = vpop.permute.xlu0 %262
  %v265 = vadd.f32 %v260, %v263
  %v266 = vadd.f32 %v265, 0.001
  %268 = vrot.lane.b32.xlu0 %v255, 126
  %v269 = vpop.permute.xlu0 %268
  %v271 = vmul.f32 %v255, %v269
  %273 = vrot.lane.b32.xlu0 %v271, 127
  %v274 = vpop.permute.xlu0 %273
  %v276 = vadd.f32 %v271, %v274
  %278 = vrot.lane.b32.xlu0 %v276, 1
  %v279 = vpop.permute.xlu0 %278
  %281 = vrot.lane.b32.xlu0 %v276, 2
  %v282 = vpop.permute.xlu0 %281
  %285 = vrot.lane.b32.xlu0 %v266, 1
  %v286 = vpop.permute.xlu0 %285
  %vm288 = vcmask 7168
  %v289 = vsel %vm288, %v266, %v279
  %vm290 = vcmask 15360
  %v291 = vsel %vm290, %v289, %v282
  %vm292 = vcmask 23552
  %v293 = vsel %vm292, %v291, %v286
  %vm294 = vcmask 31744
  %v295 = vsel %vm294, %v293, %v255
  %vm296 = vcmask 64512
  %297 = vst.msk [vmem:[%s9] sm:$0xff] %vm296, %v295
  // Predicated region
  $region38: #{_value_nn_forward_impl.1} parent=0 // pred_check
    _
  $region39: #{_value_nn_forward_impl.1} parent=0 // pred_check_branch
    %299 = sbr.rel (0) target = $region41
  $region40: #{_value_nn_forward_impl.1} parent=0 // pred_region
    _
  $region41: #{_value_nn_forward_impl.1} parent=0 // pred_fallthru
    _
  // Predicated region
  $region42: #{_value_nn_forward_impl.1} parent=0 // pred_check
    _
  $region43: #{_value_nn_forward_impl.1} parent=0 // pred_check_branch
    %301 = sbr.rel (0) target = $region45
  $region44: #{_value_nn_forward_impl.1} parent=0 // pred_region
    _
  $region45: #{_value_nn_forward_impl.1} parent=0 // pred_fallthru
    _

// kernel: _value_nn_forward_impl.1
$region0: #{_value_nn_forward_impl.1}
  #allocation0 [shape = 'u32[]', space=smem, size = 0x4, offset = 0x4, fixed_abs, tag = 'smem constant byte address 0x4 - core index']
  #allocation1 [shape = 'u32[144,128]{1,0:T(1,128)}', space=vmem, size = 0x12000, scoped, tag = 'internal scratch']
  %s0 = inlined_call_operand.vmem [shape: f32[8,1], index: 0, kind: input, shape index: {}]
  %s1 = inlined_call_operand.vmem [shape: f32[1,32], index: 1, kind: input, shape index: {}]
  %s2 = inlined_call_operand.vmem [shape: f32[1,32], index: 2, kind: input, shape index: {}]
  %s3 = inlined_call_operand.vmem [shape: bf16[32,32], index: 3, kind: input, shape index: {}]
  %s4 = inlined_call_operand.vmem [shape: f32[1,32], index: 4, kind: input, shape index: {}]
  %s5 = inlined_call_operand.vmem [shape: bf16[32,32], index: 5, kind: input, shape index: {}]
  %s6 = inlined_call_operand.vmem [shape: f32[1,32], index: 6, kind: input, shape index: {}]
  %s7 = inlined_call_operand.vmem [shape: bf16[32,8], index: 7, kind: input, shape index: {}]
  %s8 = inlined_call_operand.vmem [shape: f32[1,8], index: 8, kind: input, shape index: {}]
  %s9 = inlined_call_operand.vmem [shape: f32[8,8], index: 9, kind: output, shape index: {}]
  %s10 = sld [smem:[#allocation0]]
  $region46: #{_value_nn_forward_impl.1} parent=0
    _
  %s12 = ssub.s32 1, %s10
  %s13 = scalar_select 0, %s12, %s10
  // Predicated region
  $region2: #{_value_nn_forward_impl.1} parent=0 // pred_check
    _
  $region3: #{_value_nn_forward_impl.1} parent=0 // pred_check_branch
    %15 = sbr.rel (0) target = $region5
  $region4: #{_value_nn_forward_impl.1} parent=0 // pred_region
    _
  $region5: #{_value_nn_forward_impl.1} parent=0 // pred_fallthru
    _
  // Predicated region
  $region6: #{_value_nn_forward_impl.1} parent=0 // pred_check
    _
  $region7: #{_value_nn_forward_impl.1} parent=0 // pred_check_branch
    %17 = sbr.rel (0) target = $region9
  $region8: #{_value_nn_forward_impl.1} parent=0 // pred_region
    _
  $region9: #{_value_nn_forward_impl.1} parent=0 // pred_fallthru
    _
  // Predicated region
  $region10: #{_value_nn_forward_impl.1} parent=0 // pred_check
    _
  $region11: #{_value_nn_forward_impl.1} parent=0 // pred_check_branch
    %19 = sbr.rel (0) target = $region13
  $region12: #{_value_nn_forward_impl.1} parent=0 // pred_region
    _
  $region13: #{_value_nn_forward_impl.1} parent=0 // pred_fallthru
    _
  // Predicated region
  $region14: #{_value_nn_forward_impl.1} parent=0 // pred_check
    _
  $region15: #{_value_nn_forward_impl.1} parent=0 // pred_check_branch
    %21 = sbr.rel (0) target = $region17
  $region16: #{_value_nn_forward_impl.1} parent=0 // pred_region
    _
  $region17: #{_value_nn_forward_impl.1} parent=0 // pred_fallthru
    _
  // Predicated region
  $region18: #{_value_nn_forward_impl.1} parent=0 // pred_check
    _
  $region19: #{_value_nn_forward_impl.1} parent=0 // pred_check_branch
    %23 = sbr.rel (0) target = $region21
  $region20: #{_value_nn_forward_impl.1} parent=0 // pred_region
    _
  $region21: #{_value_nn_forward_impl.1} parent=0 // pred_fallthru
    _
  // Predicated region
  $region22: #{_value_nn_forward_impl.1} parent=0 // pred_check
    _
  $region23: #{_value_nn_forward_impl.1} parent=0 // pred_check_branch
    %25 = sbr.rel (0) target = $region25
  $region24: #{_value_nn_forward_impl.1} parent=0 // pred_region
    _
  $region25: #{_value_nn_forward_impl.1} parent=0 // pred_fallthru
    _
  // Predicated region
  $region26: #{_value_nn_forward_impl.1} parent=0 // pred_check
    _
  $region27: #{_value_nn_forward_impl.1} parent=0 // pred_check_branch
    %27 = sbr.rel (0) target = $region29
  $region28: #{_value_nn_forward_impl.1} parent=0 // pred_region
    _
  $region29: #{_value_nn_forward_impl.1} parent=0 // pred_fallthru
    _
  // Predicated region
  $region30: #{_value_nn_forward_impl.1} parent=0 // pred_check
    _
  $region31: #{_value_nn_forward_impl.1} parent=0 // pred_check_branch
    %29 = sbr.rel (0) target = $region33
  $region32: #{_value_nn_forward_impl.1} parent=0 // pred_region
    _
  $region33: #{_value_nn_forward_impl.1} parent=0 // pred_fallthru
    _
  // Predicated region
  $region34: #{_value_nn_forward_impl.1} parent=0 // pred_check
    _
  $region35: #{_value_nn_forward_impl.1} parent=0 // pred_check_branch
    %31 = sbr.rel (0) target = $region37
  $region36: #{_value_nn_forward_impl.1} parent=0 // pred_region
    _
  $region37: #{_value_nn_forward_impl.1} parent=0 // pred_fallthru
    _
  %v33 = vld [vmem:[%s0] sm:$0xff]
  %v34 = vld [vmem:[%s1] sm:$0x1]
  %36 = vset.pattern.permute.xlu0 0
  %37 = vperm.xlu0 %36, %v33
  %v38 = vpop.permute.xlu0 %37
  %v41 = vlaneseq
  %v42 = vshrl.u32 %v41, 7
  %v43 = vsub.s32 0, %v42
  %v44 = vrot.slane %v34, %v43
  %v46 = vmul.f32 %v38, %v44
  %v47 = vld [vmem:[%s2] sm:$0x1]
  %v49 = vlaneseq
  %v50 = vshrl.u32 %v49, 7
  %v51 = vsub.s32 0, %v50
  %v52 = vrot.slane %v47, %v51
  %v54 = vadd.f32 %v46, %v52
  %v55 = vmax.f32 %v54, 0.0
  %v56 = vpack.c.bf16 %v55, %v55
  %v57 = vld [vmem:[%s3] sm:$0xf]
  %v58 = vld [vmem:[%s3 + $0x4] sm:$0xf]
  %v59 = vld [vmem:[%s3 + $0x8] sm:$0xf]
  %v60 = vld [vmem:[%s3 + $0xc] sm:$0xf]
  %v61 = vld [vmem:[%s4] sm:$0x1]
  %v63 = vlaneseq
  %v64 = vshrl.u32 %v63, 7
  %v65 = vsub.s32 0, %v64
  %v66 = vrot.slane %v61, %v65
  %v72 = vunpack.c.l.b16 %v57
  %v73 = vunpack.c.l.b16 %v58
  %v74 = vunpack.c.l.b16 %v59
  %v75 = vunpack.c.l.b16 %v60
  %v76 = vpack.c.b16 %v73, %v72
  %v77 = vpack.c.b16 %v75, %v74
  %vm80 = vcmask 261120
  %v82 = vsel %vm80, %v56, 0
  %84 = vmatprep.subr.bf16.mxu0 0
  %85 = vmatpush1.bf16.msra.mxu0 0
  %86 = vmatprep.subr.bf16.mxu0 0
  %87 = vmatpush1.bf16.msra.mxu0 0
  %88 = vmatprep.subr.bf16.mxu0 0
  %89 = vmatpush1.bf16.msra.mxu0 0
  %90 = vmatprep.subr.bf16.mxu0 0
  %91 = vmatpush1.bf16.msra.mxu0 0
  %92 = vmatprep.subr.bf16.mxu0 0
  %93 = vmatpush1.bf16.msra.mxu0 0
  %94 = vmatprep.subr.bf16.mxu0 0
  %95 = vmatpush1.bf16.msra.mxu0 0
  %96 = vmatprep.subr.bf16.mxu0 0
  %97 = vmatpush1.bf16.msra.mxu0 %v77
  %98 = vmatprep.subr.bf16.mxu0 0
  %99 = vmatpush1.bf16.msra.mxu0 %v76
  %100 = vmatprep.subr.bf16.mxu0 0
  %101 = vmatpush2.bf16.msra.mxu0 0
  %102 = vmatprep.subr.bf16.mxu0 0
  %103 = vmatpush2.bf16.msra.mxu0 0
  %104 = vmatprep.subr.bf16.mxu0 0
  %105 = vmatpush2.bf16.msra.mxu0 0
  %106 = vmatprep.subr.bf16.mxu0 0
  %107 = vmatpush2.bf16.msra.mxu0 0
  %108 = vmatprep.subr.bf16.mxu0 0
  %109 = vmatpush2.bf16.msra.mxu0 0
  %110 = vmatprep.subr.bf16.mxu0 0
  %111 = vmatpush2.bf16.msra.mxu0 0
  %112 = vmatprep.subr.bf16.mxu0 0
  %113 = vmatpush2.bf16.msra.mxu0 0
  %114 = vmatprep.subr.bf16.mxu0 0
  %115 = vmatpush2.bf16.msra.mxu0 0
  %116 = vmatprep.mubr.bf16.mxu0 0
  %117 = vmatmul.mubr.bf16.gmra.mxu0 %v82
  %v118 = vpop.f32.mrf.mxu0
  %v119 = vadd.f32 %v66, %v118
  %v120 = vpop.f32.mrf.mxu0
  %v121 = vpop.f32.mrf.mxu0
  %v122 = vpop.f32.mrf.mxu0
  %123 = vdwg.mxu0
  %v124 = vmax.f32 %v119, 0.0
  %v125 = vpack.c.bf16 %v124, %v124
  %v126 = vld [vmem:[%s5] sm:$0xf]
  %v127 = vld [vmem:[%s5 + $0x4] sm:$0xf]
  %v128 = vld [vmem:[%s5 + $0x8] sm:$0xf]
  %v129 = vld [vmem:[%s5 + $0xc] sm:$0xf]
  %v130 = vld [vmem:[%s6] sm:$0x1]
  %v132 = vlaneseq
  %v133 = vshrl.u32 %v132, 7
  %v134 = vsub.s32 0, %v133
  %v135 = vrot.slane %v130, %v134
  %v141 = vunpack.c.l.b16 %v126
  %v142 = vunpack.c.l.b16 %v127
  %v143 = vunpack.c.l.b16 %v128
  %v144 = vunpack.c.l.b16 %v129
  %v145 = vpack.c.b16 %v142, %v141
  %v146 = vpack.c.b16 %v144, %v143
  %v150 = vsel %vm80, %v125, 0
  %152 = vmatprep.subr.bf16.mxu0 0
  %153 = vmatpush1.bf16.msra.mxu0 0
  %154 = vmatprep.subr.bf16.mxu0 0
  %155 = vmatpush1.bf16.msra.mxu0 0
  %156 = vmatprep.subr.bf16.mxu0 0
  %157 = vmatpush1.bf16.msra.mxu0 0
  %158 = vmatprep.subr.bf16.mxu0 0
  %159 = vmatpush1.bf16.msra.mxu0 0
  %160 = vmatprep.subr.bf16.mxu0 0
  %161 = vmatpush1.bf16.msra.mxu0 0
  %162 = vmatprep.subr.bf16.mxu0 0
  %163 = vmatpush1.bf16.msra.mxu0 0
  %164 = vmatprep.subr.bf16.mxu0 0
  %165 = vmatpush1.bf16.msra.mxu0 %v146
  %166 = vmatprep.subr.bf16.mxu0 0
  %167 = vmatpush1.bf16.msra.mxu0 %v145
  %168 = vmatprep.subr.bf16.mxu0 0
  %169 = vmatpush2.bf16.msra.mxu0 0
  %170 = vmatprep.subr.bf16.mxu0 0
  %171 = vmatpush2.bf16.msra.mxu0 0
  %172 = vmatprep.subr.bf16.mxu0 0
  %173 = vmatpush2.bf16.msra.mxu0 0
  %174 = vmatprep.subr.bf16.mxu0 0
  %175 = vmatpush2.bf16.msra.mxu0 0
  %176 = vmatprep.subr.bf16.mxu0 0
  %177 = vmatpush2.bf16.msra.mxu0 0
  %178 = vmatprep.subr.bf16.mxu0 0
  %179 = vmatpush2.bf16.msra.mxu0 0
  %180 = vmatprep.subr.bf16.mxu0 0
  %181 = vmatpush2.bf16.msra.mxu0 0
  %182 = vmatprep.subr.bf16.mxu0 0
  %183 = vmatpush2.bf16.msra.mxu0 0
  %184 = vmatprep.mubr.bf16.mxu0 0
  %185 = vmatmul.mubr.bf16.gmra.mxu0 %v150
  %v186 = vpop.f32.mrf.mxu0
  %v187 = vadd.f32 %v135, %v186
  %v188 = vpop.f32.mrf.mxu0
  %v189 = vpop.f32.mrf.mxu0
  %v190 = vpop.f32.mrf.mxu0
  %191 = vdwg.mxu0
  %v192 = vmax.f32 %v187, 0.0
  %v193 = vpack.c.bf16 %v192, %v192
  %v194 = vld [vmem:[%s7] sm:$0xf]
  %v195 = vld [vmem:[%s7 + $0x4] sm:$0xf]
  %v196 = vld [vmem:[%s7 + $0x8] sm:$0xf]
  %v197 = vld [vmem:[%s7 + $0xc] sm:$0xf]
  %v198 = vld [vmem:[%s8] sm:$0x1]
  %v200 = vlaneseq
  %v201 = vshrl.u32 %v200, 7
  %v202 = vsub.s32 0, %v201
  %v203 = vrot.slane %v198, %v202
  %v209 = vunpack.c.l.b16 %v194
  %v210 = vunpack.c.l.b16 %v195
  %v211 = vunpack.c.l.b16 %v196
  %v212 = vunpack.c.l.b16 %v197
  %v213 = vpack.c.b16 %v210, %v209
  %v214 = vpack.c.b16 %v212, %v211
  %v218 = vsel %vm80, %v193, 0
  %220 = vmatprep.subr.bf16.mxu0 0
  %221 = vmatpush1.bf16.msra.mxu0 0
  %222 = vmatprep.subr.bf16.mxu0 0
  %223 = vmatpush1.bf16.msra.mxu0 0
  %224 = vmatprep.subr.bf16.mxu0 0
  %225 = vmatpush1.bf16.msra.mxu0 0
  %226 = vmatprep.subr.bf16.mxu0 0
  %227 = vmatpush1.bf16.msra.mxu0 0
  %228 = vmatprep.subr.bf16.mxu0 0
  %229 = vmatpush1.bf16.msra.mxu0 0
  %230 = vmatprep.subr.bf16.mxu0 0
  %231 = vmatpush1.bf16.msra.mxu0 0
  %232 = vmatprep.subr.bf16.mxu0 0
  %233 = vmatpush1.bf16.msra.mxu0 %v214
  %234 = vmatprep.subr.bf16.mxu0 0
  %235 = vmatpush1.bf16.msra.mxu0 %v213
  %236 = vmatprep.subr.bf16.mxu0 0
  %237 = vmatpush2.bf16.msra.mxu0 0
  %238 = vmatprep.subr.bf16.mxu0 0
  %239 = vmatpush2.bf16.msra.mxu0 0
  %240 = vmatprep.subr.bf16.mxu0 0
  %241 = vmatpush2.bf16.msra.mxu0 0
  %242 = vmatprep.subr.bf16.mxu0 0
  %243 = vmatpush2.bf16.msra.mxu0 0
  %244 = vmatprep.subr.bf16.mxu0 0
  %245 = vmatpush2.bf16.msra.mxu0 0
  %246 = vmatprep.subr.bf16.mxu0 0
  %247 = vmatpush2.bf16.msra.mxu0 0
  %248 = vmatprep.subr.bf16.mxu0 0
  %249 = vmatpush2.bf16.msra.mxu0 0
  %250 = vmatprep.subr.bf16.mxu0 0
  %251 = vmatpush2.bf16.msra.mxu0 0
  %252 = vmatprep.mubr.bf16.mxu0 0
  %253 = vmatmul.mubr.bf16.gmra.mxu0 %v218
  %v254 = vpop.f32.mrf.mxu0
  %v255 = vadd.f32 %v203, %v254
  %v256 = vpop.f32.mrf.mxu0
  %v257 = vpop.f32.mrf.mxu0
  %v258 = vpop.f32.mrf.mxu0
  %259 = vdwg.mxu0
  %v260 = vmul.f32 %v255, %v255
  %262 = vrot.lane.b32.xlu0 %v260, 127
  %v263 = vpop.permute.xlu0 %262
  %v265 = vadd.f32 %v260, %v263
  %v266 = vadd.f32 %v265, 0.001
  %268 = vrot.lane.b32.xlu0 %v255, 126
  %v269 = vpop.permute.xlu0 %268
  %v271 = vmul.f32 %v255, %v269
  %273 = vrot.lane.b32.xlu0 %v271, 127
  %v274 = vpop.permute.xlu0 %273
  %v276 = vadd.f32 %v271, %v274
  %278 = vrot.lane.b32.xlu0 %v276, 1
  %v279 = vpop.permute.xlu0 %278
  %281 = vrot.lane.b32.xlu0 %v276, 2
  %v282 = vpop.permute.xlu0 %281
  %285 = vrot.lane.b32.xlu0 %v266, 1
  %v286 = vpop.permute.xlu0 %285
  %vm288 = vcmask 7168
  %v289 = vsel %vm288, %v266, %v279
  %vm290 = vcmask 15360
  %v291 = vsel %vm290, %v289, %v282
  %vm292 = vcmask 23552
  %v293 = vsel %vm292, %v291, %v286
  %vm294 = vcmask 31744
  %v295 = vsel %vm294, %v293, %v255
  %vm296 = vcmask 64512
  %297 = vst.msk [vmem:[%s9] sm:$0xff] %vm296, %v295
  // Predicated region
  $region38: #{_value_nn_forward_impl.1} parent=0 // pred_check
    _
  $region39: #{_value_nn_forward_impl.1} parent=0 // pred_check_branch
    %299 = sbr.rel (0) target = $region41
  $region40: #{_value_nn_forward_impl.1} parent=0 // pred_region
    _
  $region41: #{_value_nn_forward_impl.1} parent=0 // pred_fallthru
    _
  // Predicated region
  $region42: #{_value_nn_forward_impl.1} parent=0 // pred_check
    _
  $region43: #{_value_nn_forward_impl.1} parent=0 // pred_check_branch
    %301 = sbr.rel (0) target = $region45
  $region44: #{_value_nn_forward_impl.1} parent=0 // pred_region
    _
  $region45: #{_value_nn_forward_impl.1} parent=0 // pred_fallthru
    _

</llo_original>
